<compile_context>
chip_gen: v5e
topology: v5e:2x2
jax: 0.10.0
libtpu: 0.0.40
codegen_flags: <defaults>
</compile_context>

<pallas_src>
import math

import jax
import jax.numpy as jnp
import numpy as np
from jax import lax
from jax.experimental import pallas as pl
from jax.experimental.pallas import tpu as pltpu


# --------------------------------------------------------------------------- #
# Scoring kernels
# --------------------------------------------------------------------------- #

def _scoring_epilogue(h, b1_ref, w2_ref, b2_ref, pool_ref, out_ref):
    """h: [T_tile, H_pad] f32 pre-bias hidden.  Writes (1, CT, 1) chunk scores.

    Reordered epilogue: chunk-sum the ReLU activations first (bf16 MXU matmul
    with M = CT), then apply w2 (1/L already folded in) on the pooled [CT,H_pad]
    slab as an exact-f32 VPU multiply + lane (XLU) reduction.
    """
    relu_h = jnp.maximum(h + b1_ref[...], 0.0).astype(jnp.bfloat16)        # [T_tile, H_pad]
    pooled = jnp.dot(pool_ref[...], relu_h,
                     preferred_element_type=jnp.float32)                   # [CT, H_pad] f32
    cs = jnp.sum(pooled * w2_ref[...], axis=-1, keepdims=True)             # [CT, 1]
    # TODO(synk): output stays (CT, 1) (masked vst); only ~CT*4 bytes per grid step.
    out_ref[...] = (cs + b2_ref[...])[None]                                # (1, CT, 1)


def _scoring_kernel(k_ref, v_ref, w1_ref, b1_ref, w2_ref, b2_ref, pool_ref, out_ref):
    """Single-D-tile path: the whole W1 fits in VMEM."""
    x = ((k_ref[0] + v_ref[0]) * 0.5).astype(jnp.bfloat16)                 # [T_tile, D]
    h = jnp.dot(x, w1_ref[...], preferred_element_type=jnp.float32)        # [T_tile, H_pad]
    _scoring_epilogue(h, b1_ref, w2_ref, b2_ref, pool_ref, out_ref)


def _scoring_kernel_dtiled(k_ref, v_ref, w1_ref, b1_ref, w2_ref, b2_ref, pool_ref,
                           out_ref, h_acc):
    """W1-over-D tiled path (grid axis 2 = D reduction, f32 accumulator in VMEM)."""
    d = pl.program_id(2)

    @pl.when(d == 0)
    def _():
        h_acc[...] = jnp.zeros_like(h_acc)

    x = ((k_ref[0] + v_ref[0]) * 0.5).astype(jnp.bfloat16)                 # [T_tile, D_tile]
    h_acc[...] += jnp.dot(x, w1_ref[...], preferred_element_type=jnp.float32)

    @pl.when(d == pl.num_programs(2) - 1)
    def _():
        _scoring_epilogue(h_acc[...], b1_ref, w2_ref, b2_ref, pool_ref, out_ref)


# --------------------------------------------------------------------------- #
# Wrappers
# --------------------------------------------------------------------------- #

def _vmem_ceiling_bytes():
    cap = 64 << 20                      # conservative default (v7x: 64 MiB / core)
    try:
        info = pltpu.get_tpu_info()
        cap = int(getattr(info, "vmem_capacity_bytes", cap))
    except Exception:
        pass
    return max(32 << 20, (cap * 3) // 4)


def chunk_scores_pallas(keys, values, w1, b1, w2_row, b2, chunk_length,
                        *, d_tile=None, max_chunk_tile=None):
    """Returns chunk importance scores [B, num_chunks] (scoring_mode='mean')."""
    B, T, D = keys.shape
    L = int(chunk_length)
    num_chunks = -(-T // L)
    H_pad = w1.shape[1]
    itemsize = keys.dtype.itemsize
    ceiling = _vmem_ceiling_bytes()

    # ---- W1-over-D tiling (only when W1 would blow the VMEM budget) ---------
    if d_tile is None:
        w1_budget = ceiling // 4
        if D * H_pad * 2 > w1_budget and D % 128 == 0:
            dt = max(128, ((w1_budget // (2 * 2 * H_pad)) // 128) * 128)
            while D % dt:
                dt -= 128
            d_tile = dt
        else:
            d_tile = D   # TODO(synk): huge D that is not a multiple of 128 stays untiled
    assert D % d_tile == 0
    d_tiles = D // d_tile

    # ---- chunk-tile (T_tile) from a fraction of the VMEM ceiling -------------
    # k/v tiles are double-buffered (2 arrays x 2 buffers); intermediates
    # (x bf16, h f32, relu bf16) scale with tokens too.
    bytes_per_tok = 2 * 2 * d_tile * itemsize + 2 * d_tile + 6 * H_pad
    target_tokens = max(L, min(8192, (ceiling // 3) // max(bytes_per_tok, 1)))
    CT = max(1, min(num_chunks, target_tokens // L))
    if max_chunk_tile is not None:
        CT = min(CT, int(max_chunk_tile))
    if CT < num_chunks:
        num_tiles = -(-num_chunks // CT)
        CT = -(-num_chunks // num_tiles)          # balance tiles
        CT = min(-(-CT // 8) * 8, num_chunks)     # keep (8,128)-legal blocks
    num_tiles = -(-num_chunks // CT)
    nc_pad = num_tiles * CT
    T_tile = CT * L
    T_pad = nc_pad * L

    # Zero-pad (same semantics as the PyTorch module's padding; the extra whole
    # chunks added for tile alignment are sliced off below).
    if T_pad > T:
        k_s = jnp.concatenate([keys, jnp.zeros((B, T_pad - T, D), keys.dtype)], axis=1)
        v_s = jnp.concatenate([values, jnp.zeros((B, T_pad - T, D), values.dtype)], axis=1)
    else:
        k_s, v_s = keys, values

    # Per-tile chunk-sum pooling matrix with exact 1.0 entries in bf16
    # (single-pass bf16 MXU, half the VMEM/HBM of f32).  1/L (mean) is folded
    # into w2 so the pooled result needs no extra scaling pass.
    pool = (jnp.arange(T_tile)[None, :] // L ==
            jnp.arange(CT)[:, None]).astype(jnp.bfloat16)                  # [CT, T_tile]
    w2_scaled = (w2_row * (1.0 / L)).astype(jnp.float32)                   # [1, H_pad]

    # Explicit VMEM budget for the chosen tiles.
    vmem_need = (2 * 2 * T_tile * d_tile * itemsize                        # k/v (2x buffered)
                 + (2 if d_tiles > 1 else 1) * d_tile * H_pad * 2          # W1 block(s)
                 + CT * T_tile * 2                                         # pool (1x buffered)
                 + T_tile * H_pad * 4                                      # h (scratch / live)
                 + T_tile * (d_tile + H_pad) * 2                           # x / relu bf16
                 + CT * H_pad * 4 + 4 * CT * 4 + (4 * H_pad + 8) * 4)
    vmem_limit = int(min(max(vmem_need + (8 << 20), 32 << 20), ceiling))

    single = pl.Buffered(1)   # grid-constant operands: fetch once, no double buffer
    if d_tiles == 1:
        grid = (B, num_tiles)
        kv_map = lambda b, t: (b, t, 0)
        const = lambda b, t: (0, 0)
        w1_spec = pl.BlockSpec((D, H_pad), const, pipeline_mode=single)
        out_map = lambda b, t: (b, t, 0)
        kernel = _scoring_kernel
        scratch = []
        dims = ("parallel", "parallel")
    else:
        grid = (B, num_tiles, d_tiles)
        kv_map = lambda b, t, d: (b, t, d)
        const = lambda b, t, d: (0, 0)
        w1_spec = pl.BlockSpec((d_tile, H_pad), lambda b, t, d: (d, 0))    # varies with d
        out_map = lambda b, t, d: (b, t, 0)
        kernel = _scoring_kernel_dtiled
        scratch = [pltpu.VMEM((T_tile, H_pad), jnp.float32)]               # h accumulator
        dims = ("parallel", "parallel", "arbitrary")

    out = pl.pallas_call(
        kernel,
        out_shape=jax.ShapeDtypeStruct((B, nc_pad, 1), jnp.float32),
        grid_spec=pltpu.PrefetchScalarGridSpec(
            num_scalar_prefetch=0,
            grid=grid,
            in_specs=[
                pl.BlockSpec((1, T_tile, d_tile), kv_map),
                pl.BlockSpec((1, T_tile, d_tile), kv_map),
                w1_spec,
                pl.BlockSpec((1, H_pad), const, pipeline_mode=single),
                pl.BlockSpec((1, H_pad), const, pipeline_mode=single),
                pl.BlockSpec((1, 1), const, pipeline_mode=single),
                pl.BlockSpec((CT, T_tile), const, pipeline_mode=single),
            ],
            out_specs=pl.BlockSpec((1, CT, 1), out_map),
            scratch_shapes=scratch,
        ),
        compiler_params=pltpu.CompilerParams(
            dimension_semantics=dims,
            vmem_limit_bytes=vmem_limit,
        ),
    )(k_s, v_s, w1, b1, w2_scaled, b2, pool)
    return out[:, :num_chunks, 0]                     # [B, num_chunks]


def gather_chunks_pallas(keys, values, topk_idx, chunk_length):
    """Gathers the kept chunks (indices sorted ascending, matching the PyTorch
    boolean-mask gather).  Requires T % L == 0 (as does torch's .view)."""
    B, T, D = keys.shape
    L = int(chunk_length)
    assert T % L == 0, "ragged last chunk selection is ill-defined in the reference too"
    num_chunks = T // L
    keep = int(topk_idx.shape[1])
    k4 = keys.reshape(B, num_chunks, L, D)
    v4 = values.reshape(B, num_chunks, L, D)

    NSPLIT = 2 if keep >= 8 else 1      # 2nd parallel axis: both v7x TCs issue DMAs
    per_split = -(-keep // NSPLIT)
    W = min(8, keep)                    # in-flight DMA window per k/v stream

    def _gather_kernel(idx_ref, k_hbm, v_hbm, ok_hbm, ov_hbm, sems):
        b = pl.program_id(0)
        s = pl.program_id(1)
        start = s * per_split
        count = jnp.minimum(per_split, keep - start)

        def _copies(j):
            c = idx_ref[b, j]
            slot = j % W
            ck = pltpu.make_async_copy(k_hbm.at[b, c], ok_hbm.at[b, j], sems.at[0, slot])
            cv = pltpu.make_async_copy(v_hbm.at[b, c], ov_hbm.at[b, j], sems.at[1, slot])
            return ck, cv

        def _issue(j):
            ck, cv = _copies(j)
            ck.start()
            cv.start()

        def _wait(j):
            ck, cv = _copies(j)
            ck.wait()
            cv.wait()

        # TODO(synk): coalesce contiguous runs of sorted chunk ids into fewer, larger
        # DMAs (bucketed static run lengths) -- per-descriptor cost still dominates
        # for very small chunks.
        nwin = jnp.minimum(W, count)

        def prologue(t, c):
            _issue(start + t)
            return c
        lax.fori_loop(0, nwin, prologue, 0)

        def body(t, c):
            _wait(start + t)

            @pl.when(t + W < count)
            def _():
                _issue(start + t + W)
            return c
        lax.fori_loop(0, count, body, 0)

    ok, ov = pl.pallas_call(
        _gather_kernel,
        out_shape=(jax.ShapeDtypeStruct((B, keep, L, D), keys.dtype),
                   jax.ShapeDtypeStruct((B, keep, L, D), values.dtype)),
        grid_spec=pltpu.PrefetchScalarGridSpec(
            num_scalar_prefetch=1,                     # top-k chunk table -> SMEM
            grid=(B, NSPLIT),
            in_specs=[pl.BlockSpec(memory_space=pl.ANY),
                      pl.BlockSpec(memory_space=pl.ANY)],
            out_specs=(pl.BlockSpec(memory_space=pl.ANY),
                       pl.BlockSpec(memory_space=pl.ANY)),
            scratch_shapes=[pltpu.SemaphoreType.DMA((2, W))],
        ),
        compiler_params=pltpu.CompilerParams(
            dimension_semantics=("parallel", "parallel")),
    )(topk_idx, k4, v4)
    return ok.reshape(B, keep * L, D), ov.reshape(B, keep * L, D)


# --------------------------------------------------------------------------- #
# Module
# --------------------------------------------------------------------------- #

def _xavier_uniform(key, shape):
    fan_in, fan_out = shape
    limit = math.sqrt(6.0 / (fan_in + fan_out))
    return jax.random.uniform(key, shape, jnp.float32, -limit, limit)


class ChunkKVCompressorPallas:
    """JAX/Pallas port of ChunkKVCompressor.forward (scoring_mode='mean')."""

    def __init__(self, hidden_size, compression_ratio=0.5, chunk_length=20,
                 scoring_mode="mean", key=None, d_tile=None, max_chunk_tile=None):
        # TODO(synk): scoring_mode='max' (per-chunk max of token scores) not implemented in-kernel.
        assert scoring_mode == "mean"
        self.hidden_size = hidden_size
        self.compression_ratio = compression_ratio
        self.chunk_length = chunk_length
        self._d_tile = d_tile
        self._max_chunk_tile = max_chunk_tile
        H = hidden_size // 2
        H_pad = ((H + 127) // 128) * 128               # lane-pad MXU N dimension
        key = jax.random.PRNGKey(42) if key is None else key
        k1, k2 = jax.random.split(key)
        w1 = _xavier_uniform(k1, (hidden_size, H))
        self.w1 = (jnp.zeros((hidden_size, H_pad), jnp.float32)
                   .at[:, :H].set(w1).astype(jnp.bfloat16))        # [D, H_pad] bf16
        self.b1 = jnp.zeros((1, H_pad), jnp.float32)
        w2 = _xavier_uniform(k2, (H, 1))
        self.w2_row = jnp.zeros((1, H_pad), jnp.float32).at[0, :H].set(w2[:, 0])
        self.b2 = jnp.zeros((1, 1), jnp.float32)
        # TODO(synk): compression-statistics buffers (total_original_size, ...) are
        # host-side bookkeeping, not part of the kernel output; omitted.

    def __call__(self, keys, values):
        B, T, D = keys.shape
        L = self.chunk_length
        num_chunks = (T + L - 1) // L
        keep_chunks = max(1, int(num_chunks * (1 - self.compression_ratio)))
        scores = chunk_scores_pallas(keys, values, self.w1, self.b1, self.w2_row,
                                     self.b2, L, d_tile=self._d_tile,
                                     max_chunk_tile=self._max_chunk_tile)
        topk_idx = jax.lax.top_k(scores, keep_chunks)[1]
        topk_idx = jnp.sort(topk_idx, axis=-1).astype(jnp.int32)   # mask-gather keeps seq order
        return gather_chunks_pallas(keys, values, topk_idx, L)


# --------------------------------------------------------------------------- #
# Pure-JAX score reference (mirrors the kernel's bf16 matmul / bf16 pooling)
# --------------------------------------------------------------------------- #

def _reference_scores(keys, values, w1, b1, w2_row, b2, L):
    B, T, D = keys.shape
    num_chunks = (T + L - 1) // L
    T_pad = num_chunks * L
    comb = (keys + values) * 0.5
    if T_pad > T:
        comb = jnp.concatenate([comb, jnp.zeros((B, T_pad - T, D), comb.dtype)], axis=1)
    x = comb.astype(jnp.bfloat16)
    h = jnp.einsum("btd,dh->bth", x, w1, preferred_element_type=jnp.float32) + b1[0]
    relu = jnp.maximum(h, 0.0).astype(jnp.bfloat16).astype(jnp.float32)
    pooled = relu.reshape(B, num_chunks, L, -1).sum(axis=2)          # [B, nc, H_pad]
    cs = jnp.sum(pooled * (w2_row[0] * (1.0 / L)), axis=-1) + b2[0, 0]
    return cs                                                        # [B, num_chunks]


if __name__ == "__main__":
    def run_case(B, T, D, L, ratio, data_key, **tile_kwargs):
        kk, kv = jax.random.split(data_key)
        keys = jax.random.normal(kk, (B, T, D), jnp.float32)
        values = jax.random.normal(kv, (B, T, D), jnp.float32)
        comp = ChunkKVCompressorPallas(hidden_size=D, compression_ratio=ratio,
                                       chunk_length=L, scoring_mode="mean",
                                       key=jax.random.PRNGKey(1), **tile_kwargs)
        ck, cv = comp(keys, values)
        ck = jax.block_until_ready(ck)
        cv = jax.block_until_ready(cv)

        num_chunks = (T + L - 1) // L
        keep = max(1, int(num_chunks * (1 - ratio)))
        assert ck.shape == (B, keep * L, D) and cv.shape == (B, keep * L, D)

        # 1) scores: Pallas vs mirrored pure-JAX reference
        p_scores = jax.block_until_ready(
            chunk_scores_pallas(keys, values, comp.w1, comp.b1, comp.w2_row, comp.b2, L,
                                d_tile=tile_kwargs.get("d_tile"),
                                max_chunk_tile=tile_kwargs.get("max_chunk_tile")))
        r_scores = _reference_scores(keys, values, comp.w1, comp.b1, comp.w2_row,
                                     comp.b2, L)
        assert np.allclose(np.asarray(p_scores), np.asarray(r_scores),
                           rtol=2e-3, atol=2e-3)

        # 2) gather: module output vs numpy gather with the *same* top-k indices
        idx = np.asarray(jnp.sort(jax.lax.top_k(p_scores, keep)[1], axis=-1))
        k4 = np.asarray(keys).reshape(B, num_chunks, L, D)
        v4 = np.asarray(values).reshape(B, num_chunks, L, D)
        rk = np.take_along_axis(k4, idx[:, :, None, None], axis=1).reshape(B, keep * L, D)
        rv = np.take_along_axis(v4, idx[:, :, None, None], axis=1).reshape(B, keep * L, D)
        assert np.array_equal(np.asarray(ck), rk)
        assert np.array_equal(np.asarray(cv), rv)

    root = jax.random.PRNGKey(0)
    k1, k2, k3 = jax.random.split(root, 3)
    # small: 6 chunks -> keep 3 (single scoring tile, single D tile)
    run_case(B=2, T=96, D=64, L=16, ratio=0.5, data_key=k1)
    # longer: 250 chunks -> keep 125; forces the multi-tile scoring path + chunk padding
    run_case(B=2, T=4000, D=64, L=16, ratio=0.5, data_key=k2, max_chunk_tile=64)
    # wider hidden: exercises the W1-over-D accumulation path (2 D tiles of 128)
    run_case(B=2, T=256, D=256, L=16, ratio=0.5, data_key=k3, d_tile=128)
    print("KERNEL_OK")
</pallas_src>

<mosaic_0001>
module attributes {stable_mosaic.version = 11 : i64} {
  func.func @_scoring_kernel(%arg0: i32, %arg1: i32, %arg2: memref<1x96x64xf32, #tpu.memory_space<vmem>>, %arg3: memref<1x96x64xf32, #tpu.memory_space<vmem>>, %arg4: memref<64x128xbf16, #tpu.memory_space<vmem>>, %arg5: memref<1x128xf32, #tpu.memory_space<vmem>>, %arg6: memref<1x128xf32, #tpu.memory_space<vmem>>, %arg7: memref<1x1xf32, #tpu.memory_space<vmem>>, %arg8: memref<6x96xbf16, #tpu.memory_space<vmem>>, %arg9: memref<1x6x1xf32, #tpu.memory_space<vmem>>) attributes {dimension_semantics = [#tpu.dimension_semantics<parallel>, #tpu.dimension_semantics<parallel>], iteration_bounds = array<i64: 2, 1>, scalar_prefetch = 0 : i64, scratch_operands = 0 : i64, tpu.core_type = #tpu.core_type<tc>, window_params = [{transform_indices = @transform_0, window_bounds = array<i64: 1, 96, 64>}, {transform_indices = @transform_1, window_bounds = array<i64: 1, 96, 64>}, {pipeline_mode = #tpu.pipeline_mode<synchronous>, transform_indices = @transform_2, window_bounds = array<i64: 64, 128>}, {pipeline_mode = #tpu.pipeline_mode<synchronous>, transform_indices = @transform_3, window_bounds = array<i64: 1, 128>}, {pipeline_mode = #tpu.pipeline_mode<synchronous>, transform_indices = @transform_4, window_bounds = array<i64: 1, 128>}, {pipeline_mode = #tpu.pipeline_mode<synchronous>, transform_indices = @transform_5, window_bounds = array<i64: 1, 1>}, {pipeline_mode = #tpu.pipeline_mode<synchronous>, transform_indices = @transform_6, window_bounds = array<i64: 6, 96>}, {transform_indices = @transform_7, window_bounds = array<i64: 1, 6, 1>}]} {
    %c0 = arith.constant 0 : index
    %c0_0 = arith.constant 0 : index
    %c0_1 = arith.constant 0 : index
    %0 = vector.load %arg2[%c0, %c0_0, %c0_1] : memref<1x96x64xf32, #tpu.memory_space<vmem>>, vector<1x96x64xf32>
    %1 = vector.shape_cast %0 : vector<1x96x64xf32> to vector<96x64xf32>
    %c0_2 = arith.constant 0 : index
    %c0_3 = arith.constant 0 : index
    %c0_4 = arith.constant 0 : index
    %2 = vector.load %arg3[%c0_2, %c0_3, %c0_4] : memref<1x96x64xf32, #tpu.memory_space<vmem>>, vector<1x96x64xf32>
    %3 = vector.shape_cast %2 : vector<1x96x64xf32> to vector<96x64xf32>
    %4 = arith.addf %1, %3 : vector<96x64xf32>
    %cst = arith.constant 5.000000e-01 : f32
    %5 = vector.broadcast %cst : f32 to vector<96x64xf32>
    %6 = arith.mulf %4, %5 : vector<96x64xf32>
    %7 = arith.truncf %6 : vector<96x64xf32> to vector<96x64xbf16>
    %c0_5 = arith.constant 0 : index
    %c0_6 = arith.constant 0 : index
    %8 = vector.load %arg4[%c0_5, %c0_6] : memref<64x128xbf16, #tpu.memory_space<vmem>>, vector<64x128xbf16>
    %cst_7 = arith.constant dense<0.000000e+00> : vector<96x128xf32>
    %9 = tpu.matmul %7, %8, %cst_7 {dimension_numbers = #tpu.dot_dimension_numbers<[1], [0], [0], [1], [0, 0, 1, 1], [], []>} : vector<96x64xbf16>, vector<64x128xbf16>, vector<96x128xf32> -> vector<96x128xf32>
    %c0_8 = arith.constant 0 : index
    %c0_9 = arith.constant 0 : index
    %10 = vector.load %arg5[%c0_8, %c0_9] : memref<1x128xf32, #tpu.memory_space<vmem>>, vector<1x128xf32>
    %11 = vector.broadcast %10 : vector<1x128xf32> to vector<96x128xf32>
    %12 = arith.addf %9, %11 : vector<96x128xf32>
    %cst_10 = arith.constant 0.000000e+00 : f32
    %13 = vector.broadcast %cst_10 : f32 to vector<96x128xf32>
    %14 = arith.maximumf %12, %13 : vector<96x128xf32>
    %15 = arith.truncf %14 : vector<96x128xf32> to vector<96x128xbf16>
    %c0_11 = arith.constant 0 : index
    %c0_12 = arith.constant 0 : index
    %16 = vector.load %arg8[%c0_11, %c0_12] : memref<6x96xbf16, #tpu.memory_space<vmem>>, vector<6x96xbf16>
    %cst_13 = arith.constant dense<0.000000e+00> : vector<6x128xf32>
    %17 = tpu.matmul %16, %15, %cst_13 {dimension_numbers = #tpu.dot_dimension_numbers<[1], [0], [0], [1], [0, 0, 1, 1], [], []>} : vector<6x96xbf16>, vector<96x128xbf16>, vector<6x128xf32> -> vector<6x128xf32>
    %c0_14 = arith.constant 0 : index
    %c0_15 = arith.constant 0 : index
    %18 = vector.load %arg6[%c0_14, %c0_15] : memref<1x128xf32, #tpu.memory_space<vmem>>, vector<1x128xf32>
    %19 = vector.broadcast %18 : vector<1x128xf32> to vector<6x128xf32>
    %20 = arith.mulf %17, %19 : vector<6x128xf32>
    %cst_16 = arith.constant dense<0.000000e+00> : vector<6xf32>
    %21 = vector.multi_reduction <add>, %20, %cst_16 [1] : vector<6x128xf32> to vector<6xf32>
    %22 = vector.shape_cast %21 : vector<6xf32> to vector<6x1xf32>
    %c0_17 = arith.constant 0 : index
    %c0_18 = arith.constant 0 : index
    %23 = vector.load %arg7[%c0_17, %c0_18] : memref<1x1xf32, #tpu.memory_space<vmem>>, vector<1x1xf32>
    %24 = vector.broadcast %23 : vector<1x1xf32> to vector<6x1xf32>
    %25 = arith.addf %22, %24 : vector<6x1xf32>
    %26 = vector.shape_cast %25 : vector<6x1xf32> to vector<1x6x1xf32>
    %c0_19 = arith.constant 0 : index
    %c0_20 = arith.constant 0 : index
    %c0_21 = arith.constant 0 : index
    %27 = vector.load %arg9[%c0_19, %c0_20, %c0_21] : memref<1x6x1xf32, #tpu.memory_space<vmem>>, vector<1x6x1xf32>
    tpu.vector_store %arg9[%c0_19, %c0_20, %c0_21], %26 {strides = array<i32>} : memref<1x6x1xf32, #tpu.memory_space<vmem>>, vector<1x6x1xf32>,
    return
  }
  func.func @transform_0(%arg0: i32, %arg1: i32) -> (i32, i32, i32) {
    %c0_i32 = arith.constant 0 : i32
    %c0_i32_0 = arith.constant 0 : i32
    return %arg0, %arg1, %c0_i32 : i32, i32, i32
  }
  func.func @transform_1(%arg0: i32, %arg1: i32) -> (i32, i32, i32) {
    %c0_i32 = arith.constant 0 : i32
    %c0_i32_0 = arith.constant 0 : i32
    return %arg0, %arg1, %c0_i32 : i32, i32, i32
  }
  func.func @transform_2(%arg0: i32, %arg1: i32) -> (i32, i32) {
    %c0_i32 = arith.constant 0 : i32
    %c0_i32_0 = arith.constant 0 : i32
    %c0_i32_1 = arith.constant 0 : i32
    return %c0_i32, %c0_i32_0 : i32, i32
  }
  func.func @transform_3(%arg0: i32, %arg1: i32) -> (i32, i32) {
    %c0_i32 = arith.constant 0 : i32
    %c0_i32_0 = arith.constant 0 : i32
    %c0_i32_1 = arith.constant 0 : i32
    return %c0_i32, %c0_i32_0 : i32, i32
  }
  func.func @transform_4(%arg0: i32, %arg1: i32) -> (i32, i32) {
    %c0_i32 = arith.constant 0 : i32
    %c0_i32_0 = arith.constant 0 : i32
    %c0_i32_1 = arith.constant 0 : i32
    return %c0_i32, %c0_i32_0 : i32, i32
  }
  func.func @transform_5(%arg0: i32, %arg1: i32) -> (i32, i32) {
    %c0_i32 = arith.constant 0 : i32
    %c0_i32_0 = arith.constant 0 : i32
    %c0_i32_1 = arith.constant 0 : i32
    return %c0_i32, %c0_i32_0 : i32, i32
  }
  func.func @transform_6(%arg0: i32, %arg1: i32) -> (i32, i32) {
    %c0_i32 = arith.constant 0 : i32
    %c0_i32_0 = arith.constant 0 : i32
    %c0_i32_1 = arith.constant 0 : i32
    return %c0_i32, %c0_i32_0 : i32, i32
  }
  func.func @transform_7(%arg0: i32, %arg1: i32) -> (i32, i32, i32) {
    %c0_i32 = arith.constant 0 : i32
    %c0_i32_0 = arith.constant 0 : i32
    return %arg0, %arg1, %c0_i32 : i32, i32, i32
  }
}

</mosaic_0001>

<llo_original>
// kernel: tpu_custom_call.1
$region0: #{tpu_custom_call.1}
  #allocation0 [shape = 'u32[]', space=smem, size = 0x4, offset = 0x4, fixed_abs, tag = 'smem constant byte address 0x4 - core index']
  #allocation1 [shape = 'u32[72,128]{1,0:T(1,128)}', space=vmem, size = 0x9000, scoped, tag = 'internal scratch']
  #allocation2 [shape = 'f32[1,1]{1,0:T(1,128)S(1)}', space=vmem, size = 0x200, scoped, tag = 'scoped memory for tpu_custom_call.1']
  %s0 = inlined_call_operand.vmem [shape: f32[2,96,64], index: 0, kind: input, shape index: {}]
  %s1 = inlined_call_operand.vmem [shape: f32[2,96,64], index: 1, kind: input, shape index: {}]
  %s2 = inlined_call_operand.vmem [shape: bf16[64,128], index: 2, kind: input, shape index: {}]
  %s3 = inlined_call_operand.vmem [shape: f32[1,128], index: 3, kind: input, shape index: {}]
  %s4 = inlined_call_operand.vmem [shape: f32[1,128], index: 4, kind: input, shape index: {}]
  %s5 = inlined_call_operand.<no memory space> [shape: f32[1,1], index: 5, kind: input, shape index: {}]
  %s6 = inlined_call_operand.vmem [shape: bf16[6,96], index: 6, kind: input, shape index: {}]
  %s7 = inlined_call_operand.vmem [shape: f32[2,6,1], index: 7, kind: output, shape index: {}]
  %s8 = sld [smem:[#allocation0]]
  $region61: #{tpu_custom_call.1} parent=0
    _
  %s10 = ssub.s32 1, %s8
  %s11 = scalar_select 0, %s10, %s8
  %v12 = vstv %s5
  %13 = vst [vmem:[#allocation2] sm:$0x1] %v12
  loop: start=0, step=1, limit=4
  $region2: #{tpu_custom_call.1} parent=0 // loop_pre_header
    _
  $region3: #{tpu_custom_call.1} parent=0 // loop_header
    %s15 = sphi 0, %s19
    %p16 = scmp.ge.s32.totalorder %s15, 4
    %s22 = sphi 0, %s34
    %s23 = sphi 0, %s30
    %s24 = sphi 0, %s22
    %s25 = sphi 0, %s23
    %s26 = sphi 0, %s24
    %s27 = sphi 0, %s25
    %s39 = sphi 0, %s41
    %s42 = sphi 0, %s39
    %s43 = sphi 0, %s42
    %s59 = sphi 0, %s43
    %s67 = sphi 0, %s69
    %s70 = sphi 0, %s67
    %s71 = sphi 0, %s70
    %s87 = sphi 0, %s71
    %s91 = sphi 0, %s91
    %s93 = sphi 0, %s91
    %s94 = sphi 0, %s93
    %s108 = sphi 0, %s94
    %s112 = sphi 0, %s112
    %s114 = sphi 0, %s112
    %s115 = sphi 0, %s114
    %s129 = sphi 0, %s115
    %s133 = sphi 0, %s133
    %s135 = sphi 0, %s133
    %s136 = sphi 0, %s135
    %s150 = sphi 0, %s136
    %s154 = sphi 0, %s154
    %s156 = sphi 0, %s154
    %s157 = sphi 0, %s156
    %s171 = sphi 0, %s157
    %s175 = sphi 0, %s175
    %s177 = sphi 0, %s175
    %s178 = sphi 0, %s177
    %s192 = sphi 0, %s178
    %s200 = sphi 0, %s202
    %s203 = sphi 0, %s200
    %s204 = sphi 0, %s203
    %s220 = sphi 0, %s204
  $region4: #{tpu_custom_call.1} parent=0 // loop_header_branch
    %18 = sbr.rel (%p16) target = $region8
  $region5: #{tpu_custom_call.1} parent=0 // loop_body
    %s20 = ssub.s32 %s15, 1
    %s21 = ssub.s32 %s15, 2
    %s28 = sadd.s32 1, %s23
    %p29 = scmp.ge.s32.totalorder %s28, 1
    %s30 = scalar_select %p29, 0, %s28
    %s31 = sadd.s32 1, %s22
    %s32 = scalar_select %p29, %s31, %s22
    %p33 = scmp.ge.s32.totalorder %s32, 2
    %s34 = scalar_select %p33, 0, %s32
    %s35 = ssub.s32 %s22, %s34
    %s36 = ssub.s32 %s23, %s30
    %s37 = sor.u32 %s35, %s36
    %p38 = scmp.eq.s32.totalorder %s37, 0
    %s40 = sadd.s32 %s39, 1
    %s41 = scalar_select %p38, %s39, %s40
    %p44 = pneg %p38
    %p45 = scmp.eq.s32.totalorder %s15, 1
    %p46 = por %p44, %p45
    %p47 = scmp.ne.s32.totalorder %s39, %s42
    %p48 = scmp.eq.s32.totalorder %s15, 0
    %p49 = por %p47, %p48
    %p50 = scmp.ne.s32.totalorder %s39, %s42
    %p51 = scmp.eq.s32.totalorder %s20, 1
    %p52 = por %p50, %p51
    %p53 = scmp.ne.s32.totalorder %s42, %s43
    %p54 = scmp.eq.s32.totalorder %s20, 0
    %p55 = por %p53, %p54
    %p56 = scmp.ne.s32.totalorder %s42, %s43
    %p57 = scmp.eq.s32.totalorder %s21, 1
    %p58 = por %p56, %p57
    %p60 = scmp.ne.s32.totalorder %s43, %s59
    %p61 = scmp.eq.s32.totalorder %s21, 0
    %p62 = por %p60, %p61
    %s63 = ssub.s32 %s22, %s34
    %s64 = ssub.s32 %s23, %s30
    %s65 = sor.u32 %s63, %s64
    %p66 = scmp.eq.s32.totalorder %s65, 0
    %s68 = sadd.s32 %s67, 1
    %s69 = scalar_select %p66, %s67, %s68
    %p72 = pneg %p66
    %p73 = scmp.eq.s32.totalorder %s15, 1
    %p74 = por %p72, %p73
    %p75 = scmp.ne.s32.totalorder %s67, %s70
    %p76 = scmp.eq.s32.totalorder %s15, 0
    %p77 = por %p75, %p76
    %p78 = scmp.ne.s32.totalorder %s67, %s70
    %p79 = scmp.eq.s32.totalorder %s20, 1
    %p80 = por %p78, %p79
    %p81 = scmp.ne.s32.totalorder %s70, %s71
    %p82 = scmp.eq.s32.totalorder %s20, 0
    %p83 = por %p81, %p82
    %p84 = scmp.ne.s32.totalorder %s70, %s71
    %p85 = scmp.eq.s32.totalorder %s21, 1
    %p86 = por %p84, %p85
    %p88 = scmp.ne.s32.totalorder %s71, %s87
    %p89 = scmp.eq.s32.totalorder %s21, 0
    %p90 = por %p88, %p89
    %s92 = sadd.s32 %s91, 1
    %p95 = scmp.eq.s32.totalorder %s15, 1
    %p96 = scmp.ne.s32.totalorder %s91, %s93
    %p97 = scmp.eq.s32.totalorder %s15, 0
    %p98 = por %p96, %p97
    %p99 = scmp.ne.s32.totalorder %s91, %s93
    %p100 = scmp.eq.s32.totalorder %s20, 1
    %p101 = por %p99, %p100
    %p102 = scmp.ne.s32.totalorder %s93, %s94
    %p103 = scmp.eq.s32.totalorder %s20, 0
    %p104 = por %p102, %p103
    %p105 = scmp.ne.s32.totalorder %s93, %s94
    %p106 = scmp.eq.s32.totalorder %s21, 1
    %p107 = por %p105, %p106
    %p109 = scmp.ne.s32.totalorder %s94, %s108
    %p110 = scmp.eq.s32.totalorder %s21, 0
    %p111 = por %p109, %p110
    %s113 = sadd.s32 %s112, 1
    %p116 = scmp.eq.s32.totalorder %s15, 1
    %p117 = scmp.ne.s32.totalorder %s112, %s114
    %p118 = scmp.eq.s32.totalorder %s15, 0
    %p119 = por %p117, %p118
    %p120 = scmp.ne.s32.totalorder %s112, %s114
    %p121 = scmp.eq.s32.totalorder %s20, 1
    %p122 = por %p120, %p121
    %p123 = scmp.ne.s32.totalorder %s114, %s115
    %p124 = scmp.eq.s32.totalorder %s20, 0
    %p125 = por %p123, %p124
    %p126 = scmp.ne.s32.totalorder %s114, %s115
    %p127 = scmp.eq.s32.totalorder %s21, 1
    %p128 = por %p126, %p127
    %p130 = scmp.ne.s32.totalorder %s115, %s129
    %p131 = scmp.eq.s32.totalorder %s21, 0
    %p132 = por %p130, %p131
    %s134 = sadd.s32 %s133, 1
    %p137 = scmp.eq.s32.totalorder %s15, 1
    %p138 = scmp.ne.s32.totalorder %s133, %s135
    %p139 = scmp.eq.s32.totalorder %s15, 0
    %p140 = por %p138, %p139
    %p141 = scmp.ne.s32.totalorder %s133, %s135
    %p142 = scmp.eq.s32.totalorder %s20, 1
    %p143 = por %p141, %p142
    %p144 = scmp.ne.s32.totalorder %s135, %s136
    %p145 = scmp.eq.s32.totalorder %s20, 0
    %p146 = por %p144, %p145
    %p147 = scmp.ne.s32.totalorder %s135, %s136
    %p148 = scmp.eq.s32.totalorder %s21, 1
    %p149 = por %p147, %p148
    %p151 = scmp.ne.s32.totalorder %s136, %s150
    %p152 = scmp.eq.s32.totalorder %s21, 0
    %p153 = por %p151, %p152
    %s155 = sadd.s32 %s154, 1
    %p158 = scmp.eq.s32.totalorder %s15, 1
    %p159 = scmp.ne.s32.totalorder %s154, %s156
    %p160 = scmp.eq.s32.totalorder %s15, 0
    %p161 = por %p159, %p160
    %p162 = scmp.ne.s32.totalorder %s154, %s156
    %p163 = scmp.eq.s32.totalorder %s20, 1
    %p164 = por %p162, %p163
    %p165 = scmp.ne.s32.totalorder %s156, %s157
    %p166 = scmp.eq.s32.totalorder %s20, 0
    %p167 = por %p165, %p166
    %p168 = scmp.ne.s32.totalorder %s156, %s157
    %p169 = scmp.eq.s32.totalorder %s21, 1
    %p170 = por %p168, %p169
    %p172 = scmp.ne.s32.totalorder %s157, %s171
    %p173 = scmp.eq.s32.totalorder %s21, 0
    %p174 = por %p172, %p173
    %s176 = sadd.s32 %s175, 1
    %p179 = scmp.eq.s32.totalorder %s15, 1
    %p180 = scmp.ne.s32.totalorder %s175, %s177
    %p181 = scmp.eq.s32.totalorder %s15, 0
    %p182 = por %p180, %p181
    %p183 = scmp.ne.s32.totalorder %s175, %s177
    %p184 = scmp.eq.s32.totalorder %s20, 1
    %p185 = por %p183, %p184
    %p186 = scmp.ne.s32.totalorder %s177, %s178
    %p187 = scmp.eq.s32.totalorder %s20, 0
    %p188 = por %p186, %p187
    %p189 = scmp.ne.s32.totalorder %s177, %s178
    %p190 = scmp.eq.s32.totalorder %s21, 1
    %p191 = por %p189, %p190
    %p193 = scmp.ne.s32.totalorder %s178, %s192
    %p194 = scmp.eq.s32.totalorder %s21, 0
    %p195 = por %p193, %p194
    %s196 = ssub.s32 %s22, %s34
    %s197 = ssub.s32 %s23, %s30
    %s198 = sor.u32 %s196, %s197
    %p199 = scmp.eq.s32.totalorder %s198, 0
    %s201 = sadd.s32 %s200, 1
    %s202 = scalar_select %p199, %s200, %s201
    %p205 = pneg %p199
    %p206 = scmp.eq.s32.totalorder %s15, 1
    %p207 = por %p205, %p206
    %p208 = scmp.ne.s32.totalorder %s200, %s203
    %p209 = scmp.eq.s32.totalorder %s15, 0
    %p210 = por %p208, %p209
    %p211 = scmp.ne.s32.totalorder %s200, %s203
    %p212 = scmp.eq.s32.totalorder %s20, 1
    %p213 = por %p211, %p212
    %p214 = scmp.ne.s32.totalorder %s203, %s204
    %p215 = scmp.eq.s32.totalorder %s20, 0
    %p216 = por %p214, %p215
    %p217 = scmp.ne.s32.totalorder %s203, %s204
    %p218 = scmp.eq.s32.totalorder %s21, 1
    %p219 = por %p217, %p218
    %p221 = scmp.ne.s32.totalorder %s204, %s220
    %p222 = scmp.eq.s32.totalorder %s21, 0
    %p223 = por %p221, %p222
    %p224 = scmp.le.s32.totalorder 1, %s15
    %p225 = scmp.lt.s32.totalorder %s15, 3
    %p226 = pnand %p224, %p225
    %p227 = pneg %p226
    // Predicated region
    $region9: #{tpu_custom_call.1} parent=5 // pred_check
      _
    $region10: #{tpu_custom_call.1} parent=5 // pred_check_branch
      %229 = sbr.rel (%p226) target = $region12
    $region11: #{tpu_custom_call.1} parent=5 // pred_region
      %s230 = ssub.s32 %s15, 1
      // Predicated region
      $region13: #{tpu_custom_call.1} parent=11 // pred_check
        %p231 = pneg %p104
      $region14: #{tpu_custom_call.1} parent=11 // pred_check_branch
        %233 = sbr.rel (%p231) target = $region16
      $region15: #{tpu_custom_call.1} parent=11 // pred_region
        _
      $region16: #{tpu_custom_call.1} parent=11 // pred_fallthru
        _
      // Predicated region
      $region17: #{tpu_custom_call.1} parent=11 // pred_check
        %p234 = pneg %p125
      $region18: #{tpu_custom_call.1} parent=11 // pred_check_branch
        %236 = sbr.rel (%p234) target = $region20
      $region19: #{tpu_custom_call.1} parent=11 // pred_region
        _
      $region20: #{tpu_custom_call.1} parent=11 // pred_fallthru
        _
      // Predicated region
      $region21: #{tpu_custom_call.1} parent=11 // pred_check
        %p237 = pneg %p146
      $region22: #{tpu_custom_call.1} parent=11 // pred_check_branch
        %239 = sbr.rel (%p237) target = $region24
      $region23: #{tpu_custom_call.1} parent=11 // pred_region
        _
      $region24: #{tpu_custom_call.1} parent=11 // pred_fallthru
        _
      // Predicated region
      $region25: #{tpu_custom_call.1} parent=11 // pred_check
        %p240 = pneg %p167
      $region26: #{tpu_custom_call.1} parent=11 // pred_check_branch
        %242 = sbr.rel (%p240) target = $region28
      $region27: #{tpu_custom_call.1} parent=11 // pred_region
        _
      $region28: #{tpu_custom_call.1} parent=11 // pred_fallthru
        _
      // Predicated region
      $region29: #{tpu_custom_call.1} parent=11 // pred_check
        %p243 = pneg %p188
      $region30: #{tpu_custom_call.1} parent=11 // pred_check_branch
        %245 = sbr.rel (%p243) target = $region32
      $region31: #{tpu_custom_call.1} parent=11 // pred_region
        _
      $region32: #{tpu_custom_call.1} parent=11 // pred_fallthru
        _
    $region12: #{tpu_custom_call.1} parent=5 // pred_fallthru
      _
    %p246 = scmp.lt.s32.totalorder %s15, 2
    // Predicated region
    $region33: #{tpu_custom_call.1} parent=5 // pred_check
      %p247 = pneg %p246
    $region34: #{tpu_custom_call.1} parent=5 // pred_check_branch
      %249 = sbr.rel (%p247) target = $region36
    $region35: #{tpu_custom_call.1} parent=5 // pred_region
      // Predicated region
      $region37: #{tpu_custom_call.1} parent=35 // pred_check
        %p250 = pneg %p49
      $region38: #{tpu_custom_call.1} parent=35 // pred_check_branch
        %252 = sbr.rel (%p250) target = $region40
      $region39: #{tpu_custom_call.1} parent=35 // pred_region
        %s253 = smul.u32 12, %s23
        %p254 = scmp.lt.s32.totalorder %s22, 1
        %s255 = scalar_select %p254, %s22, 1
        %p256 = scmp.lt.s32.totalorder %s253, 11
        %s257 = scalar_select %p256, %s253, 11
        %s258 = smul.addr %s255, 12
        %s259 = sadd.s32 %s257, %s258
        %s260 = smul.addr %s259, 8
        %s261 = scalar_lea.vmem %s0, %s260
        %s262 = smul.u32 12, %s23
      $region40: #{tpu_custom_call.1} parent=35 // pred_fallthru
        _
      // Predicated region
      $region41: #{tpu_custom_call.1} parent=35 // pred_check
        %p263 = pneg %p77
      $region42: #{tpu_custom_call.1} parent=35 // pred_check_branch
        %265 = sbr.rel (%p263) target = $region44
      $region43: #{tpu_custom_call.1} parent=35 // pred_region
        %s266 = smul.u32 12, %s23
        %p267 = scmp.lt.s32.totalorder %s22, 1
        %s268 = scalar_select %p267, %s22, 1
        %p269 = scmp.lt.s32.totalorder %s266, 11
        %s270 = scalar_select %p269, %s266, 11
        %s271 = smul.addr %s268, 12
        %s272 = sadd.s32 %s270, %s271
        %s273 = smul.addr %s272, 8
        %s274 = scalar_lea.vmem %s1, %s273
        %s275 = smul.u32 12, %s23
      $region44: #{tpu_custom_call.1} parent=35 // pred_fallthru
        _
    $region36: #{tpu_custom_call.1} parent=5 // pred_fallthru
      _
    %p276 = scmp.le.s32.totalorder 1, %s15
    %p277 = scmp.lt.s32.totalorder %s15, 3
    %p278 = pnand %p276, %p277
    %p279 = pneg %p278
    // Predicated region
    $region45: #{tpu_custom_call.1} parent=5 // pred_check
      _
    $region46: #{tpu_custom_call.1} parent=5 // pred_check_branch
      %281 = sbr.rel (%p278) target = $region48
    $region47: #{tpu_custom_call.1} parent=5 // pred_region
      %s282 = ssub.s32 %s15, 1
      %s283 = smul.u32 12, %s25
      %p284 = scmp.lt.s32.totalorder %s24, 1
      %s285 = scalar_select %p284, %s24, 1
      %p286 = scmp.lt.s32.totalorder %s283, 11
      %s287 = scalar_select %p286, %s283, 11
      %s288 = smul.addr %s285, 12
      %s289 = sadd.s32 %s287, %s288
      %s290 = smul.addr %s289, 8
      %s291 = scalar_lea.vmem %s0, %s290
      %p292 = pneg %p55
      %p293 = pneg %p52
      %s294 = smul.u32 12, %s25
      %p295 = scmp.lt.s32.totalorder %s24, 1
      %s296 = scalar_select %p295, %s24, 1
      %p297 = scmp.lt.s32.totalorder %s294, 11
      %s298 = scalar_select %p297, %s294, 11
      %s299 = smul.addr %s296, 12
      %s300 = sadd.s32 %s298, %s299
      %s301 = smul.addr %s300, 8
      %s302 = scalar_lea.vmem %s1, %s301
      %p303 = pneg %p83
      %p304 = pneg %p80
      %p305 = pneg %p104
      %p306 = pneg %p101
      %p307 = pneg %p125
      %p308 = pneg %p122
      %p309 = pneg %p146
      %p310 = pneg %p143
      %p311 = pneg %p167
      %p312 = pneg %p164
      %p313 = pneg %p188
      %p314 = pneg %p185
      %p315 = pneg %p216
      %p316 = pneg %p213
      %p317 = scmp.lt.s32.totalorder %s24, 1
      %s318 = scalar_select %p317, %s24, 1
      %p319 = scmp.lt.s32.totalorder %s25, 0
      %s320 = scalar_select %p319, %s25, 0
      %s321 = sadd.s32 %s320, %s318
      %s322 = smul.addr %s321, 8
      %s323 = scalar_lea.vmem %s7, %s322
      %s324 = smul.u32 12, %s25
      %p325 = scmp.lt.s32.totalorder %s24, 1
      %s326 = scalar_select %p325, %s24, 1
      %p327 = scmp.lt.s32.totalorder %s324, 11
      %s328 = scalar_select %p327, %s324, 11
      %s329 = smul.addr %s326, 12
      %s330 = sadd.s32 %s328, %s329
      %s331 = smul.addr %s330, 8
      %s332 = scalar_lea.vmem %s0, %s331
      %s333 = smul.u32 12, %s25
      %s334 = smul.u32 12, %s25
      %p335 = scmp.lt.s32.totalorder %s24, 1
      %s336 = scalar_select %p335, %s24, 1
      %p337 = scmp.lt.s32.totalorder %s334, 11
      %s338 = scalar_select %p337, %s334, 11
      %s339 = smul.addr %s336, 12
      %s340 = sadd.s32 %s338, %s339
      %s341 = smul.addr %s340, 8
      %s342 = scalar_lea.vmem %s1, %s341
      %s343 = smul.u32 12, %s25
      %p344 = scmp.lt.s32.totalorder %s24, 1
      %s345 = scalar_select %p344, %s24, 1
      %p346 = scmp.lt.s32.totalorder %s25, 0
      %s347 = scalar_select %p346, %s25, 0
      %s348 = sadd.s32 %s347, %s345
      %s349 = smul.addr %s348, 8
      %s350 = scalar_lea.vmem %s7, %s349
      %v352 = vld [vmem:[%s332] sm:$0xff]
      %v353 = vld [vmem:[%s332 + $0x8] sm:$0xff]
      %v354 = vld [vmem:[%s332 + $0x10] sm:$0xff]
      %v355 = vld [vmem:[%s332 + $0x18] sm:$0xff]
      %v356 = vld [vmem:[%s332 + $0x20] sm:$0xff]
      %v357 = vld [vmem:[%s332 + $0x28] sm:$0xff]
      %v358 = vld [vmem:[%s332 + $0x30] sm:$0xff]
      %v359 = vld [vmem:[%s332 + $0x38] sm:$0xff]
      %v360 = vld [vmem:[%s332 + $0x40] sm:$0xff]
      %v361 = vld [vmem:[%s332 + $0x48] sm:$0xff]
      %v362 = vld [vmem:[%s332 + $0x50] sm:$0xff]
      %v363 = vld [vmem:[%s332 + $0x58] sm:$0xff]
      %v364 = vld [vmem:[%s342] sm:$0xff]
      %v365 = vld [vmem:[%s342 + $0x8] sm:$0xff]
      %v366 = vld [vmem:[%s342 + $0x10] sm:$0xff]
      %v367 = vld [vmem:[%s342 + $0x18] sm:$0xff]
      %v368 = vld [vmem:[%s342 + $0x20] sm:$0xff]
      %v369 = vld [vmem:[%s342 + $0x28] sm:$0xff]
      %v370 = vld [vmem:[%s342 + $0x30] sm:$0xff]
      %v371 = vld [vmem:[%s342 + $0x38] sm:$0xff]
      %v372 = vld [vmem:[%s342 + $0x40] sm:$0xff]
      %v373 = vld [vmem:[%s342 + $0x48] sm:$0xff]
      %v374 = vld [vmem:[%s342 + $0x50] sm:$0xff]
      %v375 = vld [vmem:[%s342 + $0x58] sm:$0xff]
      %v376 = vadd.f32 %v352, %v364
      %v377 = vadd.f32 %v353, %v365
      %v378 = vadd.f32 %v354, %v366
      %v379 = vadd.f32 %v355, %v367
      %v380 = vadd.f32 %v356, %v368
      %v381 = vadd.f32 %v357, %v369
      %v382 = vadd.f32 %v358, %v370
      %v383 = vadd.f32 %v359, %v371
      %v384 = vadd.f32 %v360, %v372
      %v385 = vadd.f32 %v361, %v373
      %v386 = vadd.f32 %v362, %v374
      %v387 = vadd.f32 %v363, %v375
      %v388 = vmul.f32 %v376, 0.5
      %v389 = vmul.f32 %v377, 0.5
      %v390 = vmul.f32 %v378, 0.5
      %v391 = vmul.f32 %v379, 0.5
      %v392 = vmul.f32 %v380, 0.5
      %v393 = vmul.f32 %v381, 0.5
      %v394 = vmul.f32 %v382, 0.5
      %v395 = vmul.f32 %v383, 0.5
      %v396 = vmul.f32 %v384, 0.5
      %v397 = vmul.f32 %v385, 0.5
      %v398 = vmul.f32 %v386, 0.5
      %v399 = vmul.f32 %v387, 0.5
      %v400 = vpack.c.bf16 %v389, %v388
      %v401 = vpack.c.bf16 %v391, %v390
      %v402 = vpack.c.bf16 %v393, %v392
      %v403 = vpack.c.bf16 %v395, %v394
      %v404 = vpack.c.bf16 %v397, %v396
      %v405 = vpack.c.bf16 %v399, %v398
      %v406 = vld [vmem:[%s2] sm:$0xf]
      %v407 = vld [vmem:[%s2 + $0x4] sm:$0xf]
      %v408 = vld [vmem:[%s2 + $0x8] sm:$0xf]
      %v409 = vld [vmem:[%s2 + $0xc] sm:$0xf]
      %v410 = vld [vmem:[%s2 + $0x10] sm:$0xf]
      %v411 = vld [vmem:[%s2 + $0x14] sm:$0xf]
      %v412 = vld [vmem:[%s2 + $0x18] sm:$0xf]
      %v413 = vld [vmem:[%s2 + $0x1c] sm:$0xf]
      %v414 = vld [vmem:[%s3] sm:$0x1]
      %v416 = vperm.slane %v414, 0
      %v426 = vunpack.c.l.b16 %v406
      %v427 = vunpack.c.l.b16 %v407
      %v428 = vunpack.c.l.b16 %v408
      %v429 = vunpack.c.l.b16 %v409
      %v430 = vunpack.c.l.b16 %v410
      %v431 = vunpack.c.l.b16 %v411
      %v432 = vunpack.c.l.b16 %v412
      %v433 = vunpack.c.l.b16 %v413
      %v434 = vpack.c.b16 %v427, %v426
      %v435 = vpack.c.b16 %v429, %v428
      %v436 = vpack.c.b16 %v431, %v430
      %v437 = vpack.c.b16 %v433, %v432
      %vm442 = vcmask 523264
      %v444 = vsel %vm442, %v400, 0
      %v447 = vsel %vm442, %v401, 0
      %v450 = vsel %vm442, %v402, 0
      %v453 = vsel %vm442, %v403, 0
      %v456 = vsel %vm442, %v404, 0
      %v459 = vsel %vm442, %v405, 0
      %461 = vmatpush.bf16.msra.mxu0 0
      %462 = vmatpush.bf16.msra.mxu0 0
      %463 = vmatpush.bf16.msra.mxu0 0
      %464 = vmatpush.bf16.msra.mxu0 0
      %465 = vmatpush.bf16.msra.mxu0 %v437
      %466 = vmatpush.bf16.msra.mxu0 %v436
      %467 = vmatpush.bf16.msra.mxu0 %v435
      %468 = vmatpush.bf16.msra.mxu0 %v434
      %469 = vmatmul.bf16.gmra.mxu0 %v444
      %v470 = vpop.f32.mrf.mxu0
      %v471 = vadd.f32 %v416, %v470
      %v472 = vpop.f32.mrf.mxu0
      %v473 = vadd.f32 %v416, %v472
      %474 = vmatmul.bf16.gmra.mxu0 %v447
      %v475 = vpop.f32.mrf.mxu0
      %v476 = vadd.f32 %v416, %v475
      %v477 = vpop.f32.mrf.mxu0
      %v478 = vadd.f32 %v416, %v477
      %479 = vmatmul.bf16.gmra.mxu0 %v450
      %v480 = vpop.f32.mrf.mxu0
      %v481 = vadd.f32 %v416, %v480
      %v482 = vpop.f32.mrf.mxu0
      %v483 = vadd.f32 %v416, %v482
      %484 = vmatmul.bf16.gmra.mxu0 %v453
      %v485 = vpop.f32.mrf.mxu0
      %v486 = vadd.f32 %v416, %v485
      %v487 = vpop.f32.mrf.mxu0
      %v488 = vadd.f32 %v416, %v487
      %489 = vmatmul.bf16.gmra.mxu0 %v456
      %v490 = vpop.f32.mrf.mxu0
      %v491 = vadd.f32 %v416, %v490
      %v492 = vpop.f32.mrf.mxu0
      %v493 = vadd.f32 %v416, %v492
      %494 = vmatmul.bf16.gmra.mxu0 %v459
      %v495 = vpop.f32.mrf.mxu0
      %v496 = vadd.f32 %v416, %v495
      %v497 = vpop.f32.mrf.mxu0
      %v498 = vadd.f32 %v416, %v497
      %499 = vdwg.mxu0
      %v500 = vmax.f32 %v471, 0.0
      %v501 = vmax.f32 %v473, 0.0
      %v502 = vmax.f32 %v476, 0.0
      %v503 = vmax.f32 %v478, 0.0
      %v504 = vmax.f32 %v481, 0.0
      %v505 = vmax.f32 %v483, 0.0
      %v506 = vmax.f32 %v486, 0.0
      %v507 = vmax.f32 %v488, 0.0
      %v508 = vmax.f32 %v491, 0.0
      %v509 = vmax.f32 %v493, 0.0
      %v510 = vmax.f32 %v496, 0.0
      %v511 = vmax.f32 %v498, 0.0
      %v512 = vpack.c.bf16 %v501, %v500
      %v513 = vpack.c.bf16 %v503, %v502
      %v514 = vpack.c.bf16 %v505, %v504
      %v515 = vpack.c.bf16 %v507, %v506
      %v516 = vpack.c.bf16 %v509, %v508
      %v517 = vpack.c.bf16 %v511, %v510
      %v518 = vld [vmem:[%s6] sm:$0x7]
      %vm519 = vcmask 785408
      %v521 = vsel %vm519, %v518, 0
      %523 = vmatpush.bf16.msra.mxu0 0
      %524 = vmatpush.bf16.msra.mxu0 0
      %525 = vmatpush.bf16.msra.mxu0 %v517
      %526 = vmatpush.bf16.msra.mxu0 %v516
      %527 = vmatpush.bf16.msra.mxu0 %v515
      %528 = vmatpush.bf16.msra.mxu0 %v514
      %529 = vmatpush.bf16.msra.mxu0 %v513
      %530 = vmatpush.bf16.msra.mxu0 %v512
      %531 = vmatmul.bf16.gmra.mxu0 %v521
      %v532 = vpop.f32.mrf.mxu0
      %v533 = vadd.f32 0.0, %v532
      %v534 = vpop.f32.mrf.mxu0
      %535 = vdwg.mxu0
      %v536 = vld [vmem:[%s4] sm:$0x1]
      %v538 = vperm.slane %v536, 0
      %v540 = vmul.f32 %v533, %v538
      %vm541 = vcmask 1045504
      %v542 = vsel %vm541, %v540, 0.0
      %543 = vadd.xlane.f32.xlu0 %v542
      %v544 = vpop.xlane.xlu0 %543
      %v545 = vld [vmem:[#allocation2] sm:$0x1]
      %v547 = vperm.slane %v545, 0
      %v549 = vadd.f32 %v544, %v547
      %vm550 = vcmask 5120
      %551 = vst.msk [vmem:[%s350] sm:$0x3f] %vm550, %v549
      %p552 = scmp.lt.s32.totalorder %s24, 1
      %s553 = scalar_select %p552, %s24, 1
      %p554 = scmp.lt.s32.totalorder %s25, 0
      %s555 = scalar_select %p554, %s25, 0
      %s556 = sadd.s32 %s555, %s553
      %s557 = smul.addr %s556, 8
      %s558 = scalar_lea.vmem %s7, %s557
      // Predicated region
      $region49: #{tpu_custom_call.1} parent=47 // pred_check
        %p559 = pneg %p213
      $region50: #{tpu_custom_call.1} parent=47 // pred_check_branch
        %561 = sbr.rel (%p559) target = $region52
      $region51: #{tpu_custom_call.1} parent=47 // pred_region
        _
      $region52: #{tpu_custom_call.1} parent=47 // pred_fallthru
        _
    $region48: #{tpu_custom_call.1} parent=5 // pred_fallthru
      _
    %p562 = scmp.le.s32.totalorder 2, %s15
    // Predicated region
    $region53: #{tpu_custom_call.1} parent=5 // pred_check
      %p563 = pneg %p562
    $region54: #{tpu_custom_call.1} parent=5 // pred_check_branch
      %565 = sbr.rel (%p563) target = $region56
    $region55: #{tpu_custom_call.1} parent=5 // pred_region
      %s566 = ssub.s32 %s15, 2
      // Predicated region
      $region57: #{tpu_custom_call.1} parent=55 // pred_check
        %p567 = pneg %p219
      $region58: #{tpu_custom_call.1} parent=55 // pred_check_branch
        %569 = sbr.rel (%p567) target = $region60
      $region59: #{tpu_custom_call.1} parent=55 // pred_region
        %p570 = scmp.lt.s32.totalorder %s26, 1
        %s571 = scalar_select %p570, %s26, 1
        %p572 = scmp.lt.s32.totalorder %s27, 0
        %s573 = scalar_select %p572, %s27, 0
        %s574 = sadd.s32 %s573, %s571
        %s575 = smul.addr %s574, 8
        %s576 = scalar_lea.vmem %s7, %s575
      $region60: #{tpu_custom_call.1} parent=55 // pred_fallthru
        _
    $region56: #{tpu_custom_call.1} parent=5 // pred_fallthru
      _
  $region6: #{tpu_custom_call.1} parent=0 // loop_footer
    %s19 = sadd.s32 1, %s15
  $region7: #{tpu_custom_call.1} parent=0 // loop_footer_branch
    %14 = sbr.rel target = $region3
  $region8: #{tpu_custom_call.1} parent=0 // loop_exit
    _

</llo_original>
